<compile_context>
chip_gen: v6e
topology: v6e:2x2x1
jax: 0.10.0
libtpu: 0.0.40
codegen_flags: <defaults>
</compile_context>

<pallas_src>
import functools

import jax
import jax.numpy as jnp
from jax.experimental import pallas as pl
from jax.experimental.pallas import tpu as pltpu

_LANE = 128


def _sublane_multiple(dtype) -> int:
    """Minimum unmasked sublane count for a dtype (sub-32-bit packs sublanes)."""
    itemsize = jnp.dtype(dtype).itemsize
    return {4: 8, 2: 16, 1: 32}[itemsize]


def _pack_lane_dense(param: jax.Array):
    """Flatten + zero-pad a bias tensor into a lane-dense (rows, 128) slab."""
    flat = param.reshape(-1)
    n = flat.shape[0]
    sub = _sublane_multiple(param.dtype)
    rows = pl.cdiv(n, _LANE)
    rows = pl.cdiv(rows, sub) * sub            # round rows up to sublane multiple
    pad = rows * _LANE - n
    if pad:
        flat = jnp.pad(flat, (0, pad))
    return flat.reshape(rows, _LANE), n


# ----------------------------------------------------------------------------
# Single-bank forward: lr_mul baked as a compile-time immediate.
# ----------------------------------------------------------------------------
def _make_scale_kernel(lr_mul: float):
    def kernel(x_ref, o_ref):
        # Single full-tile elementwise scale; lr_mul is a weak-typed immediate,
        # so the multiply stays in the parameter dtype (matches torch semantics).
        o_ref[...] = x_ref[...] * lr_mul
    return kernel


@functools.partial(jax.jit, static_argnames=("lr_mul",))
def bias_parameter_forward(param: jax.Array, lr_mul: float) -> jax.Array:
    """Equivalent of BiasParameter.forward(): param * lr_mul, computed on-TPU."""
    slab, n = _pack_lane_dense(param)
    rows, lane = slab.shape
    out = pl.pallas_call(
        _make_scale_kernel(float(lr_mul)),
        out_shape=jax.ShapeDtypeStruct((rows, lane), param.dtype),
        in_specs=[pl.BlockSpec((rows, lane), lambda: (0, 0))],
        out_specs=pl.BlockSpec((rows, lane), lambda: (0, 0)),
    )(slab)
    return out.reshape(-1)[:n].reshape(param.shape)


# ----------------------------------------------------------------------------
# Batched forward: all bias banks in one call, grid over banks, per-bank
# lr_mul via SMEM scalar prefetch.
# ----------------------------------------------------------------------------
def _bank_scale_kernel(scales_ref, x_ref, o_ref):
    s = scales_ref[pl.program_id(0)]           # per-bank f32 scalar from SMEM
    o_ref[...] = (x_ref[...] * s).astype(o_ref.dtype)


@functools.partial(jax.jit, static_argnames=("lr_muls",))
def bias_bank_forward(params: tuple, lr_muls: tuple):
    """Scale N bias banks in one pallas_call. Returns outputs in original shapes."""
    assert len(params) == len(lr_muls) and len(params) > 0
    dtype = params[0].dtype
    packed = []
    for p in params:
        assert p.dtype == dtype, "all bias banks must share a dtype"
        packed.append(_pack_lane_dense(p))
    # Common padded row count so banks stack into one (N, R, 128) slab.
    R = max(s.shape[0] for s, _ in packed)
    slabs = [s if s.shape[0] == R else jnp.pad(s, ((0, R - s.shape[0]), (0, 0)))
             for s, _ in packed]
    x = jnp.stack(slabs)                                   # (N, R, 128), lane-dense
    scales = jnp.asarray(lr_muls, dtype=jnp.float32)       # (N,) -> SMEM prefetch
    N = x.shape[0]

    out = pl.pallas_call(
        _bank_scale_kernel,
        out_shape=jax.ShapeDtypeStruct((N, R, _LANE), dtype),
        grid_spec=pltpu.PrefetchScalarGridSpec(
            num_scalar_prefetch=1,
            grid=(N,),
            in_specs=[pl.BlockSpec((1, R, _LANE), lambda i, scales: (i, 0, 0))],
            out_specs=pl.BlockSpec((1, R, _LANE), lambda i, scales: (i, 0, 0)),
        ),
        compiler_params=pltpu.CompilerParams(
            dimension_semantics=("parallel",)),            # shards over v7x's 2 TCs
    )(scales, x)

    return tuple(out[i].reshape(-1)[:n].reshape(p.shape)
                 for i, (p, (_, n)) in enumerate(zip(params, packed)))


def make_bias_parameter(shape: tuple, init_value: float = 0.0, dtype=jnp.float32):
    """Deterministic parameter init matching nn.init.constant_."""
    return jnp.full(shape, init_value, dtype=dtype)


if __name__ == "__main__":
    key = jax.random.PRNGKey(0)
    k_single, k_bank = jax.random.split(key)

    # --- single bias bank, typical StyleGAN per-channel bias shape (small) ---
    shape = (1, 32, 1, 1)
    lr_mul = 0.01
    param = jax.random.normal(k_single, shape, dtype=jnp.float32)
    out = jax.block_until_ready(bias_parameter_forward(param, lr_mul))
    assert out.shape == shape and out.dtype == jnp.float32
    assert jnp.allclose(out, param * lr_mul, atol=1e-7), "single-bank mismatch"

    # --- constant-init path matching nn.init.constant_ (module semantics) ---
    const_param = make_bias_parameter((8, 128), init_value=0.25)
    const_out = jax.block_until_ready(bias_parameter_forward(const_param, 0.01))
    assert jnp.allclose(const_out, jnp.full((8, 128), 0.0025, jnp.float32),
                        atol=1e-7), "constant-init mismatch"

    # --- batched path: several bias banks of a model in one pallas_call ---
    bank_shapes = ((32,), (64,), (1, 16, 1, 1), (8, 128))
    bank_lr_muls = (0.01, 1.0, 0.5, 2.0)
    bank_keys = jax.random.split(k_bank, len(bank_shapes))
    bank_params = tuple(jax.random.normal(kk, s, dtype=jnp.float32)
                        for kk, s in zip(bank_keys, bank_shapes))
    bank_outs = jax.block_until_ready(bias_bank_forward(bank_params, bank_lr_muls))
    for p, m, o in zip(bank_params, bank_lr_muls, bank_outs):
        assert o.shape == p.shape and o.dtype == p.dtype
        assert jnp.allclose(o, p * m, atol=1e-6), "batched-bank mismatch"

    print("KERNEL_OK")
</pallas_src>

<mosaic_0001>
module attributes {stable_mosaic.version = 11 : i64} {
  func.func @kernel(%arg0: memref<8x128xf32, #tpu.memory_space<vmem>>, %arg1: memref<8x128xf32, #tpu.memory_space<vmem>>) attributes {dimension_semantics = [], scalar_prefetch = 0 : i64, scratch_operands = 0 : i64, tpu.core_type = #tpu.core_type<tc>} {
    %c0 = arith.constant 0 : index
    %c0_0 = arith.constant 0 : index
    %0 = vector.load %arg0[%c0, %c0_0] : memref<8x128xf32, #tpu.memory_space<vmem>>, vector<8x128xf32>
    %cst = arith.constant 0.00999999977 : f32
    %1 = vector.broadcast %cst : f32 to vector<8x128xf32>
    %2 = arith.mulf %0, %1 : vector<8x128xf32>
    %c0_1 = arith.constant 0 : index
    %c0_2 = arith.constant 0 : index
    %3 = vector.load %arg1[%c0_1, %c0_2] : memref<8x128xf32, #tpu.memory_space<vmem>>, vector<8x128xf32>
    tpu.vector_store %arg1[%c0_1, %c0_2], %2 {strides = array<i32>} : memref<8x128xf32, #tpu.memory_space<vmem>>, vector<8x128xf32>,
    return
  }
}

</mosaic_0001>

<llo_original>
// kernel: bias_parameter_forward.1
$region0: #{bias_parameter_forward.1}
  #allocation0 [shape = 'u32[]', space=smem, size = 0x4, offset = 0x4, fixed_abs, tag = 'smem constant byte address 0x4 - core index']
  #allocation1 [shape = 'u32[144,128]{1,0:T(1,128)}', space=vmem, size = 0x12000, scoped, tag = 'internal scratch']
  %s0 = inlined_call_operand.vmem [shape: f32[8,128], index: 0, kind: input, shape index: {}]
  %s1 = inlined_call_operand.vmem [shape: f32[8,128], index: 1, kind: output, shape index: {}]
  %s2 = sld [smem:[#allocation0]]
  $region14: #{bias_parameter_forward.1} parent=0
    _
  %s4 = ssub.s32 1, %s2
  %s5 = scalar_select 0, %s4, %s2
  // Predicated region
  $region2: #{bias_parameter_forward.1} parent=0 // pred_check
    _
  $region3: #{bias_parameter_forward.1} parent=0 // pred_check_branch
    %7 = sbr.rel (0) target = $region5
  $region4: #{bias_parameter_forward.1} parent=0 // pred_region
    _
  $region5: #{bias_parameter_forward.1} parent=0 // pred_fallthru
    _
  %v8 = vld [vmem:[%s0] sm:$0xff]
  %v9 = vmul.f32 %v8, 0.01
  %10 = vst [vmem:[%s1] sm:$0xff] %v9
  // Predicated region
  $region6: #{bias_parameter_forward.1} parent=0 // pred_check
    _
  $region7: #{bias_parameter_forward.1} parent=0 // pred_check_branch
    %12 = sbr.rel (0) target = $region9
  $region8: #{bias_parameter_forward.1} parent=0 // pred_region
    _
  $region9: #{bias_parameter_forward.1} parent=0 // pred_fallthru
    _
  // Predicated region
  $region10: #{bias_parameter_forward.1} parent=0 // pred_check
    _
  $region11: #{bias_parameter_forward.1} parent=0 // pred_check_branch
    %14 = sbr.rel (0) target = $region13
  $region12: #{bias_parameter_forward.1} parent=0 // pred_region
    _
  $region13: #{bias_parameter_forward.1} parent=0 // pred_fallthru
    _

</llo_original>
